<compile_context>
chip_gen: v7x
topology: tpu7x:2x2x1
jax: 0.10.0
libtpu: 0.0.40
codegen_flags: <defaults>
</compile_context>

<pallas_src>
import jax
import jax.numpy as jnp
import numpy as np
from jax.experimental import pallas as pl
from jax.experimental.pallas import tpu as pltpu

NZ = 100   # nz in the PyTorch script
NP = 128   # feature width padded to one 128-lane vreg


def _round_up(x, m):
    return ((x + m - 1) // m) * m


# --------------------------- Pallas kernel ----------------------------------

def _mlp_kernel(x_ref, w1_ref, b1_ref, w2_ref, b2_ref, o_ref):
    """Fused: o = relu(x @ W1 + b1) @ W2 + b2 for one batch tile.

    x arrives as f32 and is cast to bf16 in-kernel (free filler in a
    mem-bound kernel).  MXU operands bf16, f32 accumulation; bias add and
    ReLU in f32 on the VPU.
    """
    x = x_ref[...].astype(jnp.bfloat16)                         # (tm, 100)
    h = jnp.dot(x, w1_ref[...], preferred_element_type=jnp.float32)  # (tm, 128)
    h = jnp.maximum(h + b1_ref[...], 0.0)                       # f32 VPU
    y = jnp.dot(h.astype(jnp.bfloat16), w2_ref[...],
                preferred_element_type=jnp.float32)             # (tm, 128)
    y = y + b2_ref[...]
    n_out = o_ref.shape[-1]          # 128 (lane-dense, large path) or 100 (small path)
    o_ref[...] = y[:, :n_out]


# --------------------------- Wrappers ----------------------------------------

def prepare_params(params):
    """One-time weight prep: (out,in)->(in,out) transpose, pad the output
    feature dim to 128 lanes, cast MXU operands to bf16.  NOT per-forward."""
    def to_in_out(w):
        return jnp.asarray(w, jnp.float32).T                    # (in, out)

    w1 = to_in_out(params["w1"])                                # (100, 100)
    w1 = jnp.pad(w1, ((0, 0), (0, NP - NZ))).astype(jnp.bfloat16)   # (100, 128)

    w2 = to_in_out(params["w2"])                                # (100, 100)
    w2 = jnp.pad(w2, ((0, NP - NZ), (0, NP - NZ))).astype(jnp.bfloat16)  # (128, 128)

    def pad_b(b):
        b = jnp.asarray(b, jnp.float32)
        return jnp.pad(b, (0, NP - b.shape[0])).reshape(1, NP)  # f32 bias row

    return {"w1": w1, "b1": pad_b(params["b1"]),
            "w2": w2, "b2": pad_b(params["b2"])}


def mlp_forward(prepared, x):
    """x: (B, NZ) f32  ->  (B, NZ) f32, same semantics as the PyTorch MLP."""
    B = x.shape[0]
    x = x.astype(jnp.float32)

    if B <= 256:
        # Small-batch path: one grid step, full-array blocks, no padding and
        # no trailing slice -> a single launch.
        tm, Mp, grid_n = B, B, 1
        out_w = NZ
        x_p = x
    else:
        # Large-batch path: ~512-row tiles (mem-bound sweet spot), but keep
        # the grid >= 2 steps so both TensorCores on v7x stay busy.
        tile = 512
        grid_n = max(2, -(-B // tile))
        tm = _round_up(-(-B // grid_n), 8)
        Mp = tm * grid_n
        out_w = NP                                    # 128-lane-dense output
        x_p = x if Mp == B else jnp.pad(x, ((0, Mp - B), (0, 0)))

    out = pl.pallas_call(
        _mlp_kernel,
        out_shape=jax.ShapeDtypeStruct((Mp, out_w), jnp.float32),
        grid_spec=pltpu.PrefetchScalarGridSpec(
            num_scalar_prefetch=0,
            grid=(grid_n,),
            in_specs=[
                pl.BlockSpec((tm, NZ), lambda i: (i, 0)),   # x tile (f32)
                pl.BlockSpec((NZ, NP), lambda i: (0, 0)),   # W1 (resident)
                pl.BlockSpec((1, NP), lambda i: (0, 0)),    # b1
                pl.BlockSpec((NP, NP), lambda i: (0, 0)),   # W2 (resident)
                pl.BlockSpec((1, NP), lambda i: (0, 0)),    # b2
            ],
            out_specs=pl.BlockSpec((tm, out_w), lambda i: (i, 0))),
        compiler_params=pltpu.CompilerParams(
            dimension_semantics=("parallel",)),            # v7x: 2 TCs share M
    )(x_p, prepared["w1"], prepared["b1"], prepared["w2"], prepared["b2"])

    if out_w == NZ and Mp == B:        # small-batch path: already (B, NZ)
        return out
    # TODO(synk): for fused consumers, return the padded (Mp,128) buffer and
    # skip this slice; kept here because the module contract is (B, NZ).
    return out[:B, :NZ]


# --------------------------- Pure-JAX reference ------------------------------

def mlp_forward_ref(params, x):
    h = jnp.maximum(x @ params["w1"].T + params["b1"], 0.0)
    return h @ params["w2"].T + params["b2"]


# --------------------------- Main --------------------------------------------

if __name__ == "__main__":
    key = jax.random.PRNGKey(0)
    k1, k2, k3, k4, kx, ky = jax.random.split(key, 6)

    bound = 1.0 / np.sqrt(NZ)                      # PyTorch Linear default init
    params = {
        "w1": jax.random.uniform(k1, (NZ, NZ), jnp.float32, -bound, bound),
        "b1": jax.random.uniform(k2, (NZ,), jnp.float32, -bound, bound),
        "w2": jax.random.uniform(k3, (NZ, NZ), jnp.float32, -bound, bound),
        "b2": jax.random.uniform(k4, (NZ,), jnp.float32, -bound, bound),
    }
    prepared = prepare_params(params)              # one-time weight packing

    # Small-batch path (single full-dim block, no pad, no slice).
    batch = 2
    x = jax.random.normal(kx, (batch, NZ), jnp.float32)
    out = jax.block_until_ready(mlp_forward(prepared, x))
    assert out.shape == (batch, NZ), out.shape
    ref = jax.block_until_ready(mlp_forward_ref(params, x))
    np.testing.assert_allclose(np.asarray(out), np.asarray(ref),
                               rtol=2e-2, atol=2e-2)   # bf16 MXU operands, f32 acc

    # Large-batch path (tiled, grid >= 2, 128-lane-dense output).
    batch2 = 600
    x2 = jax.random.normal(ky, (batch2, NZ), jnp.float32)
    out2 = jax.block_until_ready(mlp_forward(prepared, x2))
    assert out2.shape == (batch2, NZ), out2.shape
    ref2 = jax.block_until_ready(mlp_forward_ref(params, x2))
    np.testing.assert_allclose(np.asarray(out2), np.asarray(ref2),
                               rtol=2e-2, atol=2e-2)

    print("KERNEL_OK")
</pallas_src>

<mosaic_0001>
module attributes {stable_mosaic.version = 11 : i64} {
  func.func @_mlp_kernel(%arg0: i32, %arg1: memref<2x100xf32, #tpu.memory_space<vmem>>, %arg2: memref<100x128xbf16, #tpu.memory_space<vmem>>, %arg3: memref<1x128xf32, #tpu.memory_space<vmem>>, %arg4: memref<128x128xbf16, #tpu.memory_space<vmem>>, %arg5: memref<1x128xf32, #tpu.memory_space<vmem>>, %arg6: memref<2x100xf32, #tpu.memory_space<vmem>>) attributes {dimension_semantics = [#tpu.dimension_semantics<parallel>], iteration_bounds = array<i64: 1>, scalar_prefetch = 0 : i64, scratch_operands = 0 : i64, tpu.core_type = #tpu.core_type<tc>, window_params = [{transform_indices = @transform_0, window_bounds = array<i64: 2, 100>}, {pipeline_mode = #tpu.pipeline_mode<synchronous>, transform_indices = @transform_1, window_bounds = array<i64: 100, 128>}, {pipeline_mode = #tpu.pipeline_mode<synchronous>, transform_indices = @transform_2, window_bounds = array<i64: 1, 128>}, {pipeline_mode = #tpu.pipeline_mode<synchronous>, transform_indices = @transform_3, window_bounds = array<i64: 128, 128>}, {pipeline_mode = #tpu.pipeline_mode<synchronous>, transform_indices = @transform_4, window_bounds = array<i64: 1, 128>}, {transform_indices = @transform_5, window_bounds = array<i64: 2, 100>}]} {
    %c0 = arith.constant 0 : index
    %c0_0 = arith.constant 0 : index
    %0 = vector.load %arg1[%c0, %c0_0] : memref<2x100xf32, #tpu.memory_space<vmem>>, vector<2x100xf32>
    %1 = arith.truncf %0 : vector<2x100xf32> to vector<2x100xbf16>
    %c0_1 = arith.constant 0 : index
    %c0_2 = arith.constant 0 : index
    %2 = vector.load %arg2[%c0_1, %c0_2] : memref<100x128xbf16, #tpu.memory_space<vmem>>, vector<100x128xbf16>
    %cst = arith.constant dense<0.000000e+00> : vector<2x128xf32>
    %3 = tpu.matmul %1, %2, %cst {dimension_numbers = #tpu.dot_dimension_numbers<[1], [0], [0], [1], [0, 0, 1, 1], [], []>} : vector<2x100xbf16>, vector<100x128xbf16>, vector<2x128xf32> -> vector<2x128xf32>
    %c0_3 = arith.constant 0 : index
    %c0_4 = arith.constant 0 : index
    %4 = vector.load %arg3[%c0_3, %c0_4] : memref<1x128xf32, #tpu.memory_space<vmem>>, vector<1x128xf32>
    %5 = vector.broadcast %4 : vector<1x128xf32> to vector<2x128xf32>
    %6 = arith.addf %3, %5 : vector<2x128xf32>
    %cst_5 = arith.constant 0.000000e+00 : f32
    %7 = vector.broadcast %cst_5 : f32 to vector<2x128xf32>
    %8 = arith.maximumf %6, %7 : vector<2x128xf32>
    %9 = arith.truncf %8 : vector<2x128xf32> to vector<2x128xbf16>
    %c0_6 = arith.constant 0 : index
    %c0_7 = arith.constant 0 : index
    %10 = vector.load %arg4[%c0_6, %c0_7] : memref<128x128xbf16, #tpu.memory_space<vmem>>, vector<128x128xbf16>
    %cst_8 = arith.constant dense<0.000000e+00> : vector<2x128xf32>
    %11 = tpu.matmul %9, %10, %cst_8 {dimension_numbers = #tpu.dot_dimension_numbers<[1], [0], [0], [1], [0, 0, 1, 1], [], []>} : vector<2x128xbf16>, vector<128x128xbf16>, vector<2x128xf32> -> vector<2x128xf32>
    %c0_9 = arith.constant 0 : index
    %c0_10 = arith.constant 0 : index
    %12 = vector.load %arg5[%c0_9, %c0_10] : memref<1x128xf32, #tpu.memory_space<vmem>>, vector<1x128xf32>
    %13 = vector.broadcast %12 : vector<1x128xf32> to vector<2x128xf32>
    %14 = arith.addf %11, %13 : vector<2x128xf32>
    %15 = vector.extract_strided_slice %14 {offsets = [0, 0], sizes = [2, 100], strides = [1, 1]} : vector<2x128xf32> to vector<2x100xf32>
    %c0_11 = arith.constant 0 : index
    %c0_12 = arith.constant 0 : index
    %16 = vector.load %arg6[%c0_11, %c0_12] : memref<2x100xf32, #tpu.memory_space<vmem>>, vector<2x100xf32>
    tpu.vector_store %arg6[%c0_11, %c0_12], %15 {strides = array<i32>} : memref<2x100xf32, #tpu.memory_space<vmem>>, vector<2x100xf32>,
    return
  }
  func.func @transform_0(%arg0: i32) -> (i32, i32) {
    %c0_i32 = arith.constant 0 : i32
    %c0_i32_0 = arith.constant 0 : i32
    return %arg0, %c0_i32 : i32, i32
  }
  func.func @transform_1(%arg0: i32) -> (i32, i32) {
    %c0_i32 = arith.constant 0 : i32
    %c0_i32_0 = arith.constant 0 : i32
    %c0_i32_1 = arith.constant 0 : i32
    return %c0_i32, %c0_i32_0 : i32, i32
  }
  func.func @transform_2(%arg0: i32) -> (i32, i32) {
    %c0_i32 = arith.constant 0 : i32
    %c0_i32_0 = arith.constant 0 : i32
    %c0_i32_1 = arith.constant 0 : i32
    return %c0_i32, %c0_i32_0 : i32, i32
  }
  func.func @transform_3(%arg0: i32) -> (i32, i32) {
    %c0_i32 = arith.constant 0 : i32
    %c0_i32_0 = arith.constant 0 : i32
    %c0_i32_1 = arith.constant 0 : i32
    return %c0_i32, %c0_i32_0 : i32, i32
  }
  func.func @transform_4(%arg0: i32) -> (i32, i32) {
    %c0_i32 = arith.constant 0 : i32
    %c0_i32_0 = arith.constant 0 : i32
    %c0_i32_1 = arith.constant 0 : i32
    return %c0_i32, %c0_i32_0 : i32, i32
  }
  func.func @transform_5(%arg0: i32) -> (i32, i32) {
    %c0_i32 = arith.constant 0 : i32
    %c0_i32_0 = arith.constant 0 : i32
    return %arg0, %c0_i32 : i32, i32
  }
}

</mosaic_0001>

<llo_original>
// kernel: tpu_custom_call.1
$region0: #{tpu_custom_call.1}
  #allocation0 [shape = 'u32[]', space=smem, size = 0x4, offset = 0x4, fixed_abs, tag = 'smem constant byte address 0x4 - core index']
  #allocation1 [shape = 'u32[144,128]{1,0:T(1,128)}', space=vmem, size = 0x12000, scoped, tag = 'internal scratch']
  %s0 = inlined_call_operand.hbm [shape: f32[2,100], index: 0, kind: input, shape index: {}]
  %s1 = inlined_call_operand.hbm [shape: bf16[100,128], index: 1, kind: input, shape index: {}]
  %s2 = inlined_call_operand.vmem [shape: f32[1,128], index: 2, kind: input, shape index: {}]
  %s3 = inlined_call_operand.hbm [shape: bf16[128,128], index: 3, kind: input, shape index: {}]
  %s4 = inlined_call_operand.vmem [shape: f32[1,128], index: 4, kind: input, shape index: {}]
  %s5 = inlined_call_operand.hbm [shape: f32[2,100], index: 5, kind: output, shape index: {}]
  %s6 = sld [smem:[#allocation0]]
  $region42: #{tpu_custom_call.1} parent=0
    _
  %s8 = ssub.s32 1, %s6
  %s9 = scalar_select 0, %s8, %s6
  $region1: #{tpu_custom_call.1} parent=0
    #allocation2 [shape = 'u8[1024]{0}', space=vmem, size = 0x400, scoped, tag = 'input window, operand 0, single buffered']
    #allocation3 [shape = 's32[1]{0}', space=sflag, size = 0x4, scoped, tag = 'scoped memory for tpu_custom_call.1']
    #allocation4 [shape = 's32[1]{0}', space=sflag, size = 0x4, scoped, tag = 'scoped memory for tpu_custom_call.1']
    #allocation5 [shape = 'u8[26624]{0}', space=vmem, size = 0x6800, scoped, tag = 'input window, operand 1, single buffered']
    #allocation6 [shape = 's32[1]{0}', space=sflag, size = 0x4, scoped, tag = 'scoped memory for tpu_custom_call.1']
    #allocation7 [shape = 'u8[32768]{0}', space=vmem, size = 0x8000, scoped, tag = 'input window, operand 3, single buffered']
    #allocation8 [shape = 'u8[1024]{0}', space=vmem, size = 0x400, scoped, tag = 'output window, operand 0, single buffered']
    %10 = vsyncpa [#allocation3], 0
    %11 = vsyncpa [#allocation6], 0
    %12 = vsyncpa [#allocation4], 0
    // Predicated region
    $region2: #{tpu_custom_call.1} parent=1 // pred_check
      _
    $region3: #{tpu_custom_call.1} parent=1 // pred_check_branch
      %14 = sbr.rel (0) target = $region5
    $region4: #{tpu_custom_call.1} parent=1 // pred_region
      %s16 = ssub.s32 32, 32
      %17 = vsyncadd [#allocation3], %s16
      %s19 = sshll.u32 [#allocation2], 4
      %s20 = int_to_ptr.vmem [resolvable:$true] %s19
      %22 = dma.hbm_to_vmem [thread:$0]  %s0, 32, %s20, [#allocation3]
    $region5: #{tpu_custom_call.1} parent=1 // pred_fallthru
      _
    // Predicated region
    $region6: #{tpu_custom_call.1} parent=1 // pred_check
      _
    $region7: #{tpu_custom_call.1} parent=1 // pred_check_branch
      %24 = sbr.rel (0) target = $region9
    $region8: #{tpu_custom_call.1} parent=1 // pred_region
      %s26 = ssub.s32 832, 832
      %27 = vsyncadd [#allocation6], %s26
      %s28 = sshll.u32 [#allocation5], 4
      %s29 = int_to_ptr.vmem [resolvable:$true] %s28
      %34 = dma.hbm_to_vmem [thread:$0]  %s1, 832, %s29, [#allocation6], 64, 64, 4
    $region9: #{tpu_custom_call.1} parent=1 // pred_fallthru
      _
    // Predicated region
    $region10: #{tpu_custom_call.1} parent=1 // pred_check
      _
    $region11: #{tpu_custom_call.1} parent=1 // pred_check_branch
      %36 = sbr.rel (0) target = $region13
    $region12: #{tpu_custom_call.1} parent=1 // pred_region
      _
    $region13: #{tpu_custom_call.1} parent=1 // pred_fallthru
      _
    // Predicated region
    $region14: #{tpu_custom_call.1} parent=1 // pred_check
      _
    $region15: #{tpu_custom_call.1} parent=1 // pred_check_branch
      %38 = sbr.rel (0) target = $region17
    $region16: #{tpu_custom_call.1} parent=1 // pred_region
      %s40 = ssub.s32 1024, 1024
      %41 = vsyncadd [#allocation6], %s40
      %s42 = sshll.u32 [#allocation7], 4
      %s43 = int_to_ptr.vmem [resolvable:$true] %s42
      %48 = dma.hbm_to_vmem [thread:$0]  %s3, 1024, %s43, [#allocation6], 64, 64, 4
    $region17: #{tpu_custom_call.1} parent=1 // pred_fallthru
      _
    // Predicated region
    $region18: #{tpu_custom_call.1} parent=1 // pred_check
      _
    $region19: #{tpu_custom_call.1} parent=1 // pred_check_branch
      %50 = sbr.rel (0) target = $region21
    $region20: #{tpu_custom_call.1} parent=1 // pred_region
      _
    $region21: #{tpu_custom_call.1} parent=1 // pred_fallthru
      _
    // Predicated region
    $region22: #{tpu_custom_call.1} parent=1 // pred_check
      _
    $region23: #{tpu_custom_call.1} parent=1 // pred_check_branch
      %52 = sbr.rel (0) target = $region25
    $region24: #{tpu_custom_call.1} parent=1 // pred_region
      %53 = dma.done [#allocation3], 32
    $region25: #{tpu_custom_call.1} parent=1 // pred_fallthru
      _
    // Predicated region
    $region26: #{tpu_custom_call.1} parent=1 // pred_check
      _
    $region27: #{tpu_custom_call.1} parent=1 // pred_check_branch
      %55 = sbr.rel (0) target = $region29
    $region28: #{tpu_custom_call.1} parent=1 // pred_region
      %56 = dma.done [#allocation6], 832
    $region29: #{tpu_custom_call.1} parent=1 // pred_fallthru
      _
    // Predicated region
    $region30: #{tpu_custom_call.1} parent=1 // pred_check
      _
    $region31: #{tpu_custom_call.1} parent=1 // pred_check_branch
      %58 = sbr.rel (0) target = $region33
    $region32: #{tpu_custom_call.1} parent=1 // pred_region
      %59 = dma.done [#allocation6], 1024
    $region33: #{tpu_custom_call.1} parent=1 // pred_fallthru
      _
    %v61 = vld [vmem:[#allocation2] sm:$0x3]
    %v62 = vpack.c.bf16 %v61, %v61
    %v63 = vld [vmem:[#allocation5] sm:$0xf]
    %v64 = vld [vmem:[#allocation5 + $0x4] sm:$0xf]
    %v65 = vld [vmem:[#allocation5 + $0x8] sm:$0xf]
    %v66 = vld [vmem:[#allocation5 + $0xc] sm:$0xf]
    %v67 = vld [vmem:[#allocation5 + $0x10] sm:$0xf]
    %v68 = vld [vmem:[#allocation5 + $0x14] sm:$0xf]
    %v69 = vld [vmem:[#allocation5 + $0x18] sm:$0xf]
    %v70 = vld [vmem:[#allocation5 + $0x1c] sm:$0xf]
    %v71 = vld [vmem:[#allocation5 + $0x20] sm:$0xf]
    %v72 = vld [vmem:[#allocation5 + $0x24] sm:$0xf]
    %v73 = vld [vmem:[#allocation5 + $0x28] sm:$0xf]
    %v74 = vld [vmem:[#allocation5 + $0x2c] sm:$0xf]
    %v75 = vld [vmem:[#allocation5 + $0x30] sm:$0x3]
    %v76 = vld [vmem:[%s2] sm:$0x1]
    %v78 = vlaneseq
    %v79 = vshrl.u32 %v78, 7
    %v80 = vsub.s32 0, %v79
    %v81 = vrot.slane %v76, %v80
    %v96 = vunpack.c.l.b16 %v63
    %v97 = vunpack.c.l.b16 %v64
    %v98 = vunpack.c.l.b16 %v65
    %v99 = vunpack.c.l.b16 %v66
    %v100 = vunpack.c.l.b16 %v67
    %v101 = vunpack.c.l.b16 %v68
    %v102 = vunpack.c.l.b16 %v69
    %v103 = vunpack.c.l.b16 %v70
    %v104 = vunpack.c.l.b16 %v71
    %v105 = vunpack.c.l.b16 %v72
    %v106 = vunpack.c.l.b16 %v73
    %v107 = vunpack.c.l.b16 %v74
    %v108 = vunpack.c.l.b16 %v75
    %v109 = vpack.c.b16 %v97, %v96
    %v110 = vpack.c.b16 %v99, %v98
    %v111 = vpack.c.b16 %v101, %v100
    %v112 = vpack.c.b16 %v103, %v102
    %v113 = vpack.c.b16 %v105, %v104
    %v114 = vpack.c.b16 %v107, %v106
    %v115 = vpack.c.b16 %v108, %v108
    %vm122 = vcmask 818176
    %v124 = vsel %vm122, %v62, 0
    %vm126 = vcmask 1041408
    %v128 = vsel %vm126, %v115, 0
    %130 = vmatprep.subr.bf16.mxu0 0
    %131 = vmatpush1.bf16.msra.mxu0 %v109
    %132 = vmatprep.subr.bf16.mxu0 0
    %133 = vmatpush1.bf16.msra.mxu0 %v110
    %134 = vmatprep.subr.bf16.mxu0 0
    %135 = vmatpush1.bf16.msra.mxu0 %v111
    %136 = vmatprep.subr.bf16.mxu0 0
    %137 = vmatpush1.bf16.msra.mxu0 %v112
    %138 = vmatprep.subr.bf16.mxu0 0
    %139 = vmatpush1.bf16.msra.mxu0 %v113
    %140 = vmatprep.subr.bf16.mxu0 0
    %141 = vmatpush1.bf16.msra.mxu0 %v114
    %142 = vmatprep.subr.bf16.mxu0 0
    %143 = vmatpush1.bf16.msra.mxu0 %v128
    %144 = vmatprep.subr.bf16.mxu0 0
    %145 = vmatpush1.bf16.msra.mxu0 0
    %146 = vmatprep.subr.bf16.mxu0 0
    %147 = vmatpush1.bf16.msra.mxu0 0
    %148 = vmatprep.subr.bf16.mxu0 0
    %149 = vmatpush1.bf16.msra.mxu0 0
    %150 = vmatprep.subr.bf16.mxu0 0
    %151 = vmatpush1.bf16.msra.mxu0 0
    %152 = vmatprep.subr.bf16.mxu0 0
    %153 = vmatpush1.bf16.msra.mxu0 0
    %154 = vmatprep.subr.bf16.mxu0 0
    %155 = vmatpush1.bf16.msra.mxu0 0
    %156 = vmatprep.subr.bf16.mxu0 0
    %157 = vmatpush1.bf16.msra.mxu0 0
    %158 = vmatprep.subr.bf16.mxu0 0
    %159 = vmatpush1.bf16.msra.mxu0 0
    %160 = vmatprep.subr.bf16.mxu0 0
    %161 = vmatpush1.bf16.msra.mxu0 0
    %162 = vmatprep.mubr.bf16.mxu0 0
    %163 = vmatmul.mubr.bf16.gmra.mrb[0].mxu0 %v124
    %v164 = vpop.f32.mrb[0].mxu0
    %v165 = vadd.f32 %v81, %v164
    %v166 = vpop.f32.mrb[0].mxu0
    %v167 = vpop.f32.mrb[0].mxu0
    %v168 = vpop.f32.mrb[0].mxu0
    %169 = vdwg.mxu0
    %v170 = vmax.f32 %v165, 0.0
    %v171 = vpack.c.bf16 %v170, %v170
    %v172 = vld [vmem:[#allocation7] sm:$0xf]
    %v173 = vld [vmem:[#allocation7 + $0x4] sm:$0xf]
    %v174 = vld [vmem:[#allocation7 + $0x8] sm:$0xf]
    %v175 = vld [vmem:[#allocation7 + $0xc] sm:$0xf]
    %v176 = vld [vmem:[#allocation7 + $0x10] sm:$0xf]
    %v177 = vld [vmem:[#allocation7 + $0x14] sm:$0xf]
    %v178 = vld [vmem:[#allocation7 + $0x18] sm:$0xf]
    %v179 = vld [vmem:[#allocation7 + $0x1c] sm:$0xf]
    %v180 = vld [vmem:[#allocation7 + $0x20] sm:$0xf]
    %v181 = vld [vmem:[#allocation7 + $0x24] sm:$0xf]
    %v182 = vld [vmem:[#allocation7 + $0x28] sm:$0xf]
    %v183 = vld [vmem:[#allocation7 + $0x2c] sm:$0xf]
    %v184 = vld [vmem:[#allocation7 + $0x30] sm:$0xf]
    %v185 = vld [vmem:[#allocation7 + $0x34] sm:$0xf]
    %v186 = vld [vmem:[#allocation7 + $0x38] sm:$0xf]
    %v187 = vld [vmem:[#allocation7 + $0x3c] sm:$0xf]
    %v188 = vld [vmem:[%s4] sm:$0x1]
    %v190 = vlaneseq
    %v191 = vshrl.u32 %v190, 7
    %v192 = vsub.s32 0, %v191
    %v193 = vrot.slane %v188, %v192
    %v211 = vunpack.c.l.b16 %v172
    %v212 = vunpack.c.l.b16 %v173
    %v213 = vunpack.c.l.b16 %v174
    %v214 = vunpack.c.l.b16 %v175
    %v215 = vunpack.c.l.b16 %v176
    %v216 = vunpack.c.l.b16 %v177
    %v217 = vunpack.c.l.b16 %v178
    %v218 = vunpack.c.l.b16 %v179
    %v219 = vunpack.c.l.b16 %v180
    %v220 = vunpack.c.l.b16 %v181
    %v221 = vunpack.c.l.b16 %v182
    %v222 = vunpack.c.l.b16 %v183
    %v223 = vunpack.c.l.b16 %v184
    %v224 = vunpack.c.l.b16 %v185
    %v225 = vunpack.c.l.b16 %v186
    %v226 = vunpack.c.l.b16 %v187
    %v227 = vpack.c.b16 %v212, %v211
    %v228 = vpack.c.b16 %v214, %v213
    %v229 = vpack.c.b16 %v216, %v215
    %v230 = vpack.c.b16 %v218, %v217
    %v231 = vpack.c.b16 %v220, %v219
    %v232 = vpack.c.b16 %v222, %v221
    %v233 = vpack.c.b16 %v224, %v223
    %v234 = vpack.c.b16 %v226, %v225
    %243 = vmatprep.subr.bf16.mxu0 0
    %244 = vmatpush1.bf16.msra.mxu0 %v227
    %245 = vmatprep.subr.bf16.mxu0 0
    %246 = vmatpush1.bf16.msra.mxu0 %v228
    %247 = vmatprep.subr.bf16.mxu0 0
    %248 = vmatpush1.bf16.msra.mxu0 %v229
    %249 = vmatprep.subr.bf16.mxu0 0
    %250 = vmatpush1.bf16.msra.mxu0 %v230
    %251 = vmatprep.subr.bf16.mxu0 0
    %252 = vmatpush1.bf16.msra.mxu0 %v231
    %253 = vmatprep.subr.bf16.mxu0 0
    %254 = vmatpush1.bf16.msra.mxu0 %v232
    %255 = vmatprep.subr.bf16.mxu0 0
    %256 = vmatpush1.bf16.msra.mxu0 %v233
    %257 = vmatprep.subr.bf16.mxu0 0
    %258 = vmatpush1.bf16.msra.mxu0 %v234
    %259 = vmatprep.subr.bf16.mxu0 0
    %260 = vmatpush1.bf16.msra.mxu0 0
    %261 = vmatprep.subr.bf16.mxu0 0
    %262 = vmatpush1.bf16.msra.mxu0 0
    %263 = vmatprep.subr.bf16.mxu0 0
    %264 = vmatpush1.bf16.msra.mxu0 0
    %265 = vmatprep.subr.bf16.mxu0 0
    %266 = vmatpush1.bf16.msra.mxu0 0
    %267 = vmatprep.subr.bf16.mxu0 0
    %268 = vmatpush1.bf16.msra.mxu0 0
    %269 = vmatprep.subr.bf16.mxu0 0
    %270 = vmatpush1.bf16.msra.mxu0 0
    %271 = vmatprep.subr.bf16.mxu0 0
    %272 = vmatpush1.bf16.msra.mxu0 0
    %273 = vmatprep.subr.bf16.mxu0 0
    %274 = vmatpush1.bf16.msra.mxu0 0
    %275 = vmatprep.mubr.bf16.mxu0 0
    %276 = vmatmul.mubr.bf16.gmra.mrb[0].mxu0 %v171
    %v277 = vpop.f32.mrb[0].mxu0
    %v278 = vadd.f32 %v193, %v277
    %v279 = vpop.f32.mrb[0].mxu0
    %v280 = vpop.f32.mrb[0].mxu0
    %v281 = vpop.f32.mrb[0].mxu0
    %282 = vdwg.mxu0
    %vm283 = vcmask 812032
    %284 = vst.msk [vmem:[#allocation8] sm:$0x3] %vm283, %v278
    // Predicated region
    $region34: #{tpu_custom_call.1} parent=1 // pred_check
      _
    $region35: #{tpu_custom_call.1} parent=1 // pred_check_branch
      %286 = sbr.rel (0) target = $region37
    $region36: #{tpu_custom_call.1} parent=1 // pred_region
      %s288 = ssub.s32 32, 32
      %289 = vsyncadd [#allocation4], %s288
      %s291 = sshll.u32 [#allocation8], 4
      %s292 = int_to_ptr.vmem [resolvable:$true] %s291
      %294 = dma.vmem_to_hbm [thread:$0]  %s292, 32, %s5, [#allocation4]
    $region37: #{tpu_custom_call.1} parent=1 // pred_fallthru
      _
    // Predicated region
    $region38: #{tpu_custom_call.1} parent=1 // pred_check
      _
    $region39: #{tpu_custom_call.1} parent=1 // pred_check_branch
      %296 = sbr.rel (0) target = $region41
    $region40: #{tpu_custom_call.1} parent=1 // pred_region
      %297 = dma.done [#allocation4], 32
    $region41: #{tpu_custom_call.1} parent=1 // pred_fallthru
      _
    %298 = vsyncpa [#allocation3], 1
    %299 = vsyncpa [#allocation6], 1
    %300 = vsyncpa [#allocation4], 1

</llo_original>
